<compile_context>
chip_gen: v7x
topology: tpu7x:2x2x1
jax: 0.10.0
libtpu: 0.0.40
codegen_flags: <defaults>
</compile_context>

<pallas_src>
import jax
import jax.numpy as jnp
from jax.experimental import pallas as pl
from jax.experimental.pallas import tpu as pltpu

_LANE = 128
_DEFAULT_BLOCK_ELEMS = 1024 * _LANE  # per-channel elements per block (512 KiB f32)


def _normalize_kernel(img_ref, scale_ref, bias_ref, out_ref):
    # img_ref/out_ref: (C, blk) block for spatial tile t.
    # scale_ref/bias_ref: (C, 1) f32, lane-broadcast across the block.
    x = img_ref[...].astype(jnp.float32)
    out_ref[...] = (x * scale_ref[...] + bias_ref[...]).astype(out_ref.dtype)


def ext_normalize(img, mean, std, tgt=None, *, block_elems=_DEFAULT_BLOCK_ELEMS):
    """Mirrors ExtNormalize.forward: output[c] = (img[c] - mean[c]) / std[c].

    img: (C, H, W) array; mean/std: sequences of length C.
    Returns (normalized_img, tgt).
    """
    C, H, W = img.shape
    HW = H * W

    # Fold the divide out of the hot loop; keep the math in f32.
    mean_f32 = jnp.asarray(mean, dtype=jnp.float32).reshape(C, 1)
    std_f32 = jnp.asarray(std, dtype=jnp.float32).reshape(C, 1)
    scale = 1.0 / std_f32
    bias = -mean_f32 / std_f32

    # torch requires a float image; integer inputs get a float32 output here.
    out_dtype = img.dtype if jnp.issubdtype(img.dtype, jnp.floating) else jnp.float32

    img2d = img.reshape(C, HW)  # free: contiguous reshape, no data movement

    if HW <= block_elems:
        blk = HW                                            # single full-extent tile
    else:
        blk = max(_LANE, (block_elems // _LANE) * _LANE)    # multiple of 128 lanes
    n_tiles = pl.cdiv(HW, blk)                              # partial last tile is masked

    out2d = pl.pallas_call(
        _normalize_kernel,
        out_shape=jax.ShapeDtypeStruct((C, HW), out_dtype),
        grid_spec=pltpu.PrefetchScalarGridSpec(
            num_scalar_prefetch=0,
            grid=(n_tiles,),
            in_specs=[
                pl.BlockSpec((C, blk), lambda t: (0, t)),
                pl.BlockSpec((C, 1), lambda t: (0, 0)),   # fetched once (constant index)
                pl.BlockSpec((C, 1), lambda t: (0, 0)),
            ],
            out_specs=pl.BlockSpec((C, blk), lambda t: (0, t)),
        ),
        compiler_params=pltpu.CompilerParams(
            dimension_semantics=("parallel",),
        ),
    )(img2d, scale, bias)

    # TODO(synk): `inplace=True` has no JAX equivalent (arrays are immutable); ignored.
    return out2d.reshape(C, H, W), tgt


if __name__ == "__main__":
    key = jax.random.PRNGKey(0)

    def _ref(img, mean, std):
        m = jnp.asarray(mean, jnp.float32).reshape(-1, 1, 1)
        s = jnp.asarray(std, jnp.float32).reshape(-1, 1, 1)
        return (img.astype(jnp.float32) - m) / s

    # Test 1: small image, single grid step.
    C, H, W = 4, 16, 16
    k_img, k_tgt, k_img2 = jax.random.split(key, 3)
    img = jax.random.uniform(k_img, (C, H, W), dtype=jnp.float32)
    tgt = jax.random.randint(k_tgt, (H, W), 0, 10, dtype=jnp.int32)
    mean = [0.485, 0.456, 0.406, 0.5][:C]
    std = [0.229, 0.224, 0.225, 0.25][:C]

    out_img, out_tgt = ext_normalize(img, mean, std, tgt)
    out_img = jax.block_until_ready(out_img)
    assert out_img.shape == (C, H, W)
    assert out_img.dtype == img.dtype
    assert jnp.allclose(out_img, _ref(img, mean, std), atol=1e-5, rtol=1e-5)
    assert out_tgt is tgt  # label passed through unchanged

    # Test 2: multi-tile grid with a masked partial last block
    # (HW = 1600, blk = 512 -> 4 tiles, last tile only 64 valid lanes).
    C2, H2, W2 = 3, 40, 40
    img2 = jax.random.uniform(k_img2, (C2, H2, W2), dtype=jnp.float32)
    mean2, std2 = [0.485, 0.456, 0.406], [0.229, 0.224, 0.225]
    out2, _ = ext_normalize(img2, mean2, std2, None, block_elems=512)
    out2 = jax.block_until_ready(out2)
    assert out2.shape == (C2, H2, W2)
    assert jnp.allclose(out2, _ref(img2, mean2, std2), atol=1e-5, rtol=1e-5)

    print("KERNEL_OK")
</pallas_src>

<mosaic_0001>
module attributes {stable_mosaic.version = 11 : i64} {
  func.func @_normalize_kernel(%arg0: i32, %arg1: memref<4x256xf32, #tpu.memory_space<vmem>>, %arg2: memref<4x1xf32, #tpu.memory_space<vmem>>, %arg3: memref<4x1xf32, #tpu.memory_space<vmem>>, %arg4: memref<4x256xf32, #tpu.memory_space<vmem>>) attributes {dimension_semantics = [#tpu.dimension_semantics<parallel>], iteration_bounds = array<i64: 1>, scalar_prefetch = 0 : i64, scratch_operands = 0 : i64, tpu.core_type = #tpu.core_type<tc>, window_params = [{transform_indices = @transform_0, window_bounds = array<i64: 4, 256>}, {pipeline_mode = #tpu.pipeline_mode<synchronous>, transform_indices = @transform_1, window_bounds = array<i64: 4, 1>}, {pipeline_mode = #tpu.pipeline_mode<synchronous>, transform_indices = @transform_2, window_bounds = array<i64: 4, 1>}, {transform_indices = @transform_3, window_bounds = array<i64: 4, 256>}]} {
    %c0 = arith.constant 0 : index
    %c0_0 = arith.constant 0 : index
    %0 = vector.load %arg1[%c0, %c0_0] : memref<4x256xf32, #tpu.memory_space<vmem>>, vector<4x256xf32>
    %c0_1 = arith.constant 0 : index
    %c0_2 = arith.constant 0 : index
    %1 = vector.load %arg2[%c0_1, %c0_2] : memref<4x1xf32, #tpu.memory_space<vmem>>, vector<4x1xf32>
    %2 = vector.broadcast %1 : vector<4x1xf32> to vector<4x256xf32>
    %3 = arith.mulf %0, %2 : vector<4x256xf32>
    %c0_3 = arith.constant 0 : index
    %c0_4 = arith.constant 0 : index
    %4 = vector.load %arg3[%c0_3, %c0_4] : memref<4x1xf32, #tpu.memory_space<vmem>>, vector<4x1xf32>
    %5 = vector.broadcast %4 : vector<4x1xf32> to vector<4x256xf32>
    %6 = arith.addf %3, %5 : vector<4x256xf32>
    %c0_5 = arith.constant 0 : index
    %c0_6 = arith.constant 0 : index
    %7 = vector.load %arg4[%c0_5, %c0_6] : memref<4x256xf32, #tpu.memory_space<vmem>>, vector<4x256xf32>
    tpu.vector_store %arg4[%c0_5, %c0_6], %6 {strides = array<i32>} : memref<4x256xf32, #tpu.memory_space<vmem>>, vector<4x256xf32>,
    return
  }
  func.func @transform_0(%arg0: i32) -> (i32, i32) {
    %c0_i32 = arith.constant 0 : i32
    %c0_i32_0 = arith.constant 0 : i32
    return %c0_i32, %arg0 : i32, i32
  }
  func.func @transform_1(%arg0: i32) -> (i32, i32) {
    %c0_i32 = arith.constant 0 : i32
    %c0_i32_0 = arith.constant 0 : i32
    %c0_i32_1 = arith.constant 0 : i32
    return %c0_i32, %c0_i32_0 : i32, i32
  }
  func.func @transform_2(%arg0: i32) -> (i32, i32) {
    %c0_i32 = arith.constant 0 : i32
    %c0_i32_0 = arith.constant 0 : i32
    %c0_i32_1 = arith.constant 0 : i32
    return %c0_i32, %c0_i32_0 : i32, i32
  }
  func.func @transform_3(%arg0: i32) -> (i32, i32) {
    %c0_i32 = arith.constant 0 : i32
    %c0_i32_0 = arith.constant 0 : i32
    return %c0_i32, %arg0 : i32, i32
  }
}

</mosaic_0001>

<llo_original>
// kernel: tpu_custom_call.1
$region0: #{tpu_custom_call.1}
  #allocation0 [shape = 'u32[]', space=smem, size = 0x4, offset = 0x4, fixed_abs, tag = 'smem constant byte address 0x4 - core index']
  #allocation1 [shape = 'u32[144,128]{1,0:T(1,128)}', space=vmem, size = 0x12000, scoped, tag = 'internal scratch']
  %s0 = inlined_call_operand.vmem [shape: f32[4,256], index: 0, kind: input, shape index: {}]
  %s1 = inlined_call_operand.vmem [shape: f32[4,1], index: 1, kind: input, shape index: {}]
  %s2 = inlined_call_operand.vmem [shape: f32[4,1], index: 2, kind: input, shape index: {}]
  %s3 = inlined_call_operand.hbm [shape: f32[4,256], index: 3, kind: output, shape index: {}]
  %s4 = sld [smem:[#allocation0]]
  $region22: #{tpu_custom_call.1} parent=0
    _
  %s6 = ssub.s32 1, %s4
  %s7 = scalar_select 0, %s6, %s4
  $region1: #{tpu_custom_call.1} parent=0
    #allocation2 [shape = 'u8[4096]{0}', space=vmem, size = 0x1000, scoped, tag = 'output window, operand 0, single buffered']
    #allocation3 [shape = 's32[1]{0}', space=sflag, size = 0x4, scoped, tag = 'scoped memory for tpu_custom_call.1']
    %8 = vsyncpa [#allocation3], 0
    // Predicated region
    $region2: #{tpu_custom_call.1} parent=1 // pred_check
      _
    $region3: #{tpu_custom_call.1} parent=1 // pred_check_branch
      %10 = sbr.rel (0) target = $region5
    $region4: #{tpu_custom_call.1} parent=1 // pred_region
      _
    $region5: #{tpu_custom_call.1} parent=1 // pred_fallthru
      _
    // Predicated region
    $region6: #{tpu_custom_call.1} parent=1 // pred_check
      _
    $region7: #{tpu_custom_call.1} parent=1 // pred_check_branch
      %12 = sbr.rel (0) target = $region9
    $region8: #{tpu_custom_call.1} parent=1 // pred_region
      _
    $region9: #{tpu_custom_call.1} parent=1 // pred_fallthru
      _
    // Predicated region
    $region10: #{tpu_custom_call.1} parent=1 // pred_check
      _
    $region11: #{tpu_custom_call.1} parent=1 // pred_check_branch
      %14 = sbr.rel (0) target = $region13
    $region12: #{tpu_custom_call.1} parent=1 // pred_region
      _
    $region13: #{tpu_custom_call.1} parent=1 // pred_fallthru
      _
    %v15 = vld [vmem:[%s0] sm:$0xff]
    %v16 = vld [vmem:[%s1] sm:$0xf]
    %18 = vset.pattern.permute.xlu0 0
    %19 = vperm.xlu0 %18, %v16
    %v20 = vpop.permute.xlu0 %19
    %v22 = vunpack.c.l.s4 839922192
    %v23 = vunpack.c.0.s8 %v22
    %v24 = vlaneseq
    %v25 = vshrl.u32 %v24, 7
    %v26 = vsub.s32 %v23, %v25
    %v27 = vrot.slane %v20, %v26
    %v29 = vmul.f32 %v15, %v27
    %v30 = vld [vmem:[%s2] sm:$0xf]
    %32 = vset.pattern.permute.xlu0 0
    %33 = vperm.xlu0 %32, %v30
    %v34 = vpop.permute.xlu0 %33
    %v36 = vunpack.c.l.s4 839922192
    %v37 = vunpack.c.0.s8 %v36
    %v38 = vlaneseq
    %v39 = vshrl.u32 %v38, 7
    %v40 = vsub.s32 %v37, %v39
    %v41 = vrot.slane %v34, %v40
    %v43 = vadd.f32 %v29, %v41
    %44 = vst [vmem:[#allocation2] sm:$0xff] %v43
    // Predicated region
    $region14: #{tpu_custom_call.1} parent=1 // pred_check
      _
    $region15: #{tpu_custom_call.1} parent=1 // pred_check_branch
      %46 = sbr.rel (0) target = $region17
    $region16: #{tpu_custom_call.1} parent=1 // pred_region
      %s48 = ssub.s32 128, 128
      %49 = vsyncadd [#allocation3], %s48
      %s51 = sshll.u32 [#allocation2], 4
      %s52 = int_to_ptr.vmem [resolvable:$true] %s51
      %54 = dma.vmem_to_hbm [thread:$0]  %s52, 128, %s3, [#allocation3]
    $region17: #{tpu_custom_call.1} parent=1 // pred_fallthru
      _
    // Predicated region
    $region18: #{tpu_custom_call.1} parent=1 // pred_check
      _
    $region19: #{tpu_custom_call.1} parent=1 // pred_check_branch
      %56 = sbr.rel (0) target = $region21
    $region20: #{tpu_custom_call.1} parent=1 // pred_region
      %57 = dma.done [#allocation3], 128
    $region21: #{tpu_custom_call.1} parent=1 // pred_fallthru
      _
    %58 = vsyncpa [#allocation3], 1

</llo_original>
